<compile_context>
chip_gen: v7x
topology: tpu7x:2x2x1
jax: 0.10.0
libtpu: 0.0.40
codegen_flags: <defaults>
</compile_context>

<pallas_src>
import numpy as np
import jax
import jax.numpy as jnp
from jax.experimental import pallas as pl
from jax.experimental.pallas import tpu as pltpu


# ----------------------------------------------------------------------------
# Kernels
# ----------------------------------------------------------------------------
def _make_kernel_3d(rows_block, total_rows, needs_mask):
    """Dense path: blocks are (block_nc, rows_block, 128); reduce axes 1,2."""

    def kernel(pred_ref, gt_ref, inter_ref, union_ref):
        s = pl.program_id(1)

        @pl.when(s == 0)
        def _():
            inter_ref[...] = jnp.zeros_like(inter_ref)
            union_ref[...] = jnp.zeros_like(union_ref)

        pred = pred_ref[...].astype(jnp.float32)
        g = gt_ref[...].astype(jnp.float32)
        # sigmoid(x) >= 0.5  <=>  x >= 0  (skips the transcendental entirely)
        p = (pred >= 0.0).astype(jnp.float32)

        if needs_mask:  # ragged last spatial block: mask invalid sublane rows
            row = jax.lax.broadcasted_iota(jnp.int32, pred.shape, 1)
            valid = (s * rows_block + row) < total_rows
            p = jnp.where(valid, p, 0.0)
            g = jnp.where(valid, g, 0.0)

        inter_ref[...] += jnp.sum(jnp.sum(p * g, axis=2), axis=1, keepdims=True)
        union_ref[...] += jnp.sum(jnp.sum(p + g, axis=2), axis=1, keepdims=True)

    return kernel


def _make_kernel_2d(tile_s, total_s, needs_mask):
    """Generic path: blocks are (block_nc, tile_s); reduce axis 1."""

    def kernel(pred_ref, gt_ref, inter_ref, union_ref):
        s = pl.program_id(1)

        @pl.when(s == 0)
        def _():
            inter_ref[...] = jnp.zeros_like(inter_ref)
            union_ref[...] = jnp.zeros_like(union_ref)

        pred = pred_ref[...].astype(jnp.float32)
        g = gt_ref[...].astype(jnp.float32)
        p = (pred >= 0.0).astype(jnp.float32)

        if needs_mask:  # ragged last spatial block: mask invalid lanes
            lane = jax.lax.broadcasted_iota(jnp.int32, pred.shape, 1)
            valid = (s * tile_s + lane) < total_s
            p = jnp.where(valid, p, 0.0)
            g = jnp.where(valid, g, 0.0)

        inter_ref[...] += jnp.sum(p * g, axis=1, keepdims=True)
        union_ref[...] += jnp.sum(p + g, axis=1, keepdims=True)

    return kernel


# ----------------------------------------------------------------------------
# Wrapper
# ----------------------------------------------------------------------------
def dice_metric(predict, gt, activation="sigmoid", is_average=True,
                vmem_input_budget_bytes=16 << 20,
                block_rows=None, block_lanes=None):
    """Pallas implementation of DiceMetric.forward with dims=(2, 3, 4)."""
    if activation != "sigmoid":
        # TODO(synk): softmax-over-channel activation path not implemented.
        raise NotImplementedError("only activation='sigmoid' is implemented")

    N, C = int(predict.shape[0]), int(predict.shape[1])
    S = int(np.prod(predict.shape[2:]))
    NC = N * C

    elem_bytes = predict.dtype.itemsize + gt.dtype.itemsize  # one elem of each input
    # NC block: full NC when small (always a legal full-dim block), otherwise a
    # multiple of 8 so the "parallel" NC grid axis can feed v7x's two cores.
    block_nc = NC if NC <= 64 else 64
    # Elements per input block such that the double-buffered (2 inputs x 2 bufs)
    # working set stays around vmem_input_budget_bytes.
    block_elems = max(1, vmem_input_budget_bytes // (2 * elem_bytes))

    out_shape = (jax.ShapeDtypeStruct((NC, 1), jnp.float32),
                 jax.ShapeDtypeStruct((NC, 1), jnp.float32))
    out_specs = [pl.BlockSpec((block_nc, 1), lambda nc, s: (nc, 0)),
                 pl.BlockSpec((block_nc, 1), lambda nc, s: (nc, 0))]

    if S % 128 == 0:
        # Dense path: fold spatial into (rows, 128) so sublanes are fully packed
        # even when NC is tiny.
        R = S // 128
        rows = block_elems // (block_nc * 128)
        rows = max(8, min((rows // 8) * 8, 4096))
        if block_rows is not None:
            rows = int(block_rows)
        if rows >= R:
            rows = R                      # full-dim block is always legal
        needs_mask = (R % rows) != 0
        grid = (pl.cdiv(NC, block_nc), pl.cdiv(R, rows))
        pred_v = predict.reshape(NC, R, 128)   # contiguous view, no HBM pass
        gt_v = gt.reshape(NC, R, 128)
        in_specs = [pl.BlockSpec((block_nc, rows, 128), lambda nc, s: (nc, s, 0)),
                    pl.BlockSpec((block_nc, rows, 128), lambda nc, s: (nc, s, 0))]
        kernel = _make_kernel_3d(rows, R, needs_mask)
        block_in_bytes = block_nc * rows * 128 * elem_bytes
    else:
        # Generic path: lane-tiled spatial axis with an in-kernel lane mask.
        tile_s = (block_elems // block_nc) // 128 * 128
        tile_s = max(128, min(tile_s, 32768))
        if block_lanes is not None:
            tile_s = int(block_lanes)
        if tile_s >= S:
            tile_s = S                    # full-dim block is always legal
        needs_mask = (S % tile_s) != 0
        grid = (pl.cdiv(NC, block_nc), pl.cdiv(S, tile_s))
        pred_v = predict.reshape(NC, S)
        gt_v = gt.reshape(NC, S)
        in_specs = [pl.BlockSpec((block_nc, tile_s), lambda nc, s: (nc, s)),
                    pl.BlockSpec((block_nc, tile_s), lambda nc, s: (nc, s))]
        kernel = _make_kernel_2d(tile_s, S, needs_mask)
        block_in_bytes = block_nc * tile_s * elem_bytes

    # Double-buffered input working set + headroom; clamp to a v7x-safe ceiling
    # (64 MiB physical) while exceeding v5e's 16 MiB default scoped limit.
    working_bytes = 2 * block_in_bytes
    vmem_limit = int(min(48 << 20, max(32 << 20, working_bytes + (16 << 20))))

    inter, union = pl.pallas_call(
        kernel,
        out_shape=out_shape,
        grid_spec=pltpu.PrefetchScalarGridSpec(
            num_scalar_prefetch=0,
            grid=grid,
            in_specs=in_specs,
            out_specs=out_specs,
        ),
        compiler_params=pltpu.CompilerParams(
            dimension_semantics=("parallel", "arbitrary"),
            vmem_limit_bytes=vmem_limit,
        ),
    )(pred_v, gt_v)

    # Cheap epilogue (glue): dice formula + batch reduction.
    inter = inter.reshape(N, C)
    union = union.reshape(N, C)
    dice = (2.0 * inter + 1e-08) / (union + 1e-08)
    return dice.mean(axis=0) if is_average else dice.sum(axis=0)


# ----------------------------------------------------------------------------
# Pure-JAX reference mirroring the PyTorch module
# ----------------------------------------------------------------------------
def _dice_metric_ref(predict, gt, is_average=True):
    pred = jax.nn.sigmoid(predict.astype(jnp.float32))
    pred = jnp.where(pred >= 0.5, 1.0, 0.0)
    g = gt.astype(jnp.float32)
    dims = tuple(range(2, predict.ndim))
    inter = jnp.sum(pred * g, axis=dims)
    union = jnp.sum(pred, axis=dims) + jnp.sum(g, axis=dims)
    dice = (2.0 * inter + 1e-08) / (union + 1e-08)
    return dice.mean(axis=0) if is_average else dice.sum(axis=0)


if __name__ == "__main__":
    root = jax.random.PRNGKey(0)

    # (shape NCDHW, input dtype, wrapper kwargs, is_average)
    cases = [
        ((2, 3, 4, 8, 8), jnp.float32, {}, True),                      # dense path, single block
        ((2, 4, 16, 16, 8), jnp.bfloat16, {}, True),                   # native bf16 streaming
        ((2, 3, 10, 16, 8), jnp.float32, {"block_rows": 8}, False),    # ragged sublane tile (row mask)
        ((2, 3, 2, 10, 10), jnp.float32, {"block_lanes": 128}, True),  # S not multiple of 128 (lane mask)
        ((1, 65, 1, 8, 16), jnp.float32, {}, True),                    # NC > 64 -> partial NC block
    ]

    for i, (shape, dtype, kw, avg) in enumerate(cases):
        k1, k2 = jax.random.split(jax.random.fold_in(root, i))
        predict = jax.random.normal(k1, shape, dtype=jnp.float32).astype(dtype)
        gt = (jax.random.uniform(k2, shape) > 0.5).astype(dtype)

        out = jax.block_until_ready(dice_metric(predict, gt, is_average=avg, **kw))
        ref = jax.block_until_ready(_dice_metric_ref(predict, gt, is_average=avg))
        np.testing.assert_allclose(np.asarray(out), np.asarray(ref),
                                   rtol=1e-5, atol=1e-5)

    print("KERNEL_OK")
</pallas_src>

<mosaic_0001>
module attributes {stable_mosaic.version = 11 : i64} {
  func.func @kernel(%arg0: i32, %arg1: i32, %arg2: memref<6x2x128xf32, #tpu.memory_space<vmem>>, %arg3: memref<6x2x128xf32, #tpu.memory_space<vmem>>, %arg4: memref<6x1xf32, #tpu.memory_space<vmem>>, %arg5: memref<6x1xf32, #tpu.memory_space<vmem>>) attributes {dimension_semantics = [#tpu.dimension_semantics<parallel>, #tpu.dimension_semantics<arbitrary>], iteration_bounds = array<i64: 1, 1>, scalar_prefetch = 0 : i64, scratch_operands = 0 : i64, tpu.core_type = #tpu.core_type<tc>, window_params = [{transform_indices = @transform_0, window_bounds = array<i64: 6, 2, 128>}, {transform_indices = @transform_1, window_bounds = array<i64: 6, 2, 128>}, {transform_indices = @transform_2, window_bounds = array<i64: 6, 1>}, {transform_indices = @transform_3, window_bounds = array<i64: 6, 1>}]} {
    %c0_i32 = arith.constant 0 : i32
    %0 = arith.cmpi eq, %arg1, %c0_i32 : i32
    %1 = arith.extui %0 : i1 to i32
    %c0_i32_0 = arith.constant 0 : i32
    %2 = arith.cmpi ne, %1, %c0_i32_0 : i32
    scf.if %2 {
      %cst_18 = arith.constant 0.000000e+00 : f32
      %23 = vector.broadcast %cst_18 : f32 to vector<6x1xf32>
      %c0_19 = arith.constant 0 : index
      %c0_20 = arith.constant 0 : index
      %24 = vector.load %arg4[%c0_19, %c0_20] : memref<6x1xf32, #tpu.memory_space<vmem>>, vector<6x1xf32>
      tpu.vector_store %arg4[%c0_19, %c0_20], %23 {strides = array<i32>} : memref<6x1xf32, #tpu.memory_space<vmem>>, vector<6x1xf32>,
      %cst_21 = arith.constant 0.000000e+00 : f32
      %25 = vector.broadcast %cst_21 : f32 to vector<6x1xf32>
      %c0_22 = arith.constant 0 : index
      %c0_23 = arith.constant 0 : index
      %26 = vector.load %arg5[%c0_22, %c0_23] : memref<6x1xf32, #tpu.memory_space<vmem>>, vector<6x1xf32>
      tpu.vector_store %arg5[%c0_22, %c0_23], %25 {strides = array<i32>} : memref<6x1xf32, #tpu.memory_space<vmem>>, vector<6x1xf32>,
    } else {
    }
    %c0 = arith.constant 0 : index
    %c0_1 = arith.constant 0 : index
    %c0_2 = arith.constant 0 : index
    %3 = vector.load %arg2[%c0, %c0_1, %c0_2] : memref<6x2x128xf32, #tpu.memory_space<vmem>>, vector<6x2x128xf32>
    %c0_3 = arith.constant 0 : index
    %c0_4 = arith.constant 0 : index
    %c0_5 = arith.constant 0 : index
    %4 = vector.load %arg3[%c0_3, %c0_4, %c0_5] : memref<6x2x128xf32, #tpu.memory_space<vmem>>, vector<6x2x128xf32>
    %cst = arith.constant 0.000000e+00 : f32
    %5 = vector.broadcast %cst : f32 to vector<6x2x128xf32>
    %6 = arith.cmpf oge, %3, %5 : vector<6x2x128xf32>
    %7 = arith.extui %6 : vector<6x2x128xi1> to vector<6x2x128xi32>
    %8 = arith.sitofp %7 : vector<6x2x128xi32> to vector<6x2x128xf32>
    %c0_6 = arith.constant 0 : index
    %c0_7 = arith.constant 0 : index
    %9 = vector.load %arg4[%c0_6, %c0_7] : memref<6x1xf32, #tpu.memory_space<vmem>>, vector<6x1xf32>
    %10 = arith.mulf %8, %4 : vector<6x2x128xf32>
    %cst_8 = arith.constant dense<0.000000e+00> : vector<6x2xf32>
    %11 = vector.multi_reduction <add>, %10, %cst_8 [2] : vector<6x2x128xf32> to vector<6x2xf32>
    %cst_9 = arith.constant dense<0.000000e+00> : vector<6xf32>
    %12 = vector.multi_reduction <add>, %11, %cst_9 [1] : vector<6x2xf32> to vector<6xf32>
    %13 = vector.shape_cast %12 : vector<6xf32> to vector<6x1xf32>
    %14 = arith.addf %9, %13 : vector<6x1xf32>
    %c0_10 = arith.constant 0 : index
    %c0_11 = arith.constant 0 : index
    %15 = vector.load %arg4[%c0_10, %c0_11] : memref<6x1xf32, #tpu.memory_space<vmem>>, vector<6x1xf32>
    tpu.vector_store %arg4[%c0_10, %c0_11], %14 {strides = array<i32>} : memref<6x1xf32, #tpu.memory_space<vmem>>, vector<6x1xf32>,
    %c0_12 = arith.constant 0 : index
    %c0_13 = arith.constant 0 : index
    %16 = vector.load %arg5[%c0_12, %c0_13] : memref<6x1xf32, #tpu.memory_space<vmem>>, vector<6x1xf32>
    %17 = arith.addf %8, %4 : vector<6x2x128xf32>
    %cst_14 = arith.constant dense<0.000000e+00> : vector<6x2xf32>
    %18 = vector.multi_reduction <add>, %17, %cst_14 [2] : vector<6x2x128xf32> to vector<6x2xf32>
    %cst_15 = arith.constant dense<0.000000e+00> : vector<6xf32>
    %19 = vector.multi_reduction <add>, %18, %cst_15 [1] : vector<6x2xf32> to vector<6xf32>
    %20 = vector.shape_cast %19 : vector<6xf32> to vector<6x1xf32>
    %21 = arith.addf %16, %20 : vector<6x1xf32>
    %c0_16 = arith.constant 0 : index
    %c0_17 = arith.constant 0 : index
    %22 = vector.load %arg5[%c0_16, %c0_17] : memref<6x1xf32, #tpu.memory_space<vmem>>, vector<6x1xf32>
    tpu.vector_store %arg5[%c0_16, %c0_17], %21 {strides = array<i32>} : memref<6x1xf32, #tpu.memory_space<vmem>>, vector<6x1xf32>,
    return
  }
  func.func @transform_0(%arg0: i32, %arg1: i32) -> (i32, i32, i32) {
    %c0_i32 = arith.constant 0 : i32
    %c0_i32_0 = arith.constant 0 : i32
    return %arg0, %arg1, %c0_i32 : i32, i32, i32
  }
  func.func @transform_1(%arg0: i32, %arg1: i32) -> (i32, i32, i32) {
    %c0_i32 = arith.constant 0 : i32
    %c0_i32_0 = arith.constant 0 : i32
    return %arg0, %arg1, %c0_i32 : i32, i32, i32
  }
  func.func @transform_2(%arg0: i32, %arg1: i32) -> (i32, i32) {
    %c0_i32 = arith.constant 0 : i32
    %c0_i32_0 = arith.constant 0 : i32
    return %arg0, %c0_i32 : i32, i32
  }
  func.func @transform_3(%arg0: i32, %arg1: i32) -> (i32, i32) {
    %c0_i32 = arith.constant 0 : i32
    %c0_i32_0 = arith.constant 0 : i32
    return %arg0, %c0_i32 : i32, i32
  }
}

</mosaic_0001>

<llo_original>
// kernel: tpu_custom_call.1
$region0: #{tpu_custom_call.1}
  #allocation0 [shape = 'u32[]', space=smem, size = 0x4, offset = 0x4, fixed_abs, tag = 'smem constant byte address 0x4 - core index']
  #allocation1 [shape = 'u32[144,128]{1,0:T(1,128)}', space=vmem, size = 0x12000, scoped, tag = 'internal scratch']
  %s0 = inlined_call_operand.hbm [shape: f32[6,2,128], index: 0, kind: input, shape index: {}]
  %s1 = inlined_call_operand.hbm [shape: f32[6,2,128], index: 1, kind: input, shape index: {}]
  %s2 = inlined_call_operand.vmem [shape: f32[6,1], index: 2, kind: output, shape index: {0}]
  %s3 = inlined_call_operand.vmem [shape: f32[6,1], index: 3, kind: output, shape index: {1}]
  %4 = xla_tuple %s2, %s3
  %s5 = sld [smem:[#allocation0]]
  $region38: #{tpu_custom_call.1} parent=0
    _
  %s7 = ssub.s32 1, %s5
  %s8 = scalar_select 0, %s7, %s5
  $region1: #{tpu_custom_call.1} parent=0
    #allocation2 [shape = 'u8[6144]{0}', space=vmem, size = 0x1800, scoped, tag = 'input window, operand 0, single buffered']
    #allocation3 [shape = 's32[1]{0}', space=sflag, size = 0x4, scoped, tag = 'scoped memory for tpu_custom_call.1']
    #allocation4 [shape = 'u8[6144]{0}', space=vmem, size = 0x1800, scoped, tag = 'input window, operand 1, single buffered']
    #allocation5 [shape = 's32[1]{0}', space=sflag, size = 0x4, scoped, tag = 'scoped memory for tpu_custom_call.1']
    %9 = vsyncpa [#allocation3], 0
    %10 = vsyncpa [#allocation5], 0
    // Predicated region
    $region2: #{tpu_custom_call.1} parent=1 // pred_check
      _
    $region3: #{tpu_custom_call.1} parent=1 // pred_check_branch
      %12 = sbr.rel (0) target = $region5
    $region4: #{tpu_custom_call.1} parent=1 // pred_region
      %s14 = ssub.s32 192, 192
      %15 = vsyncadd [#allocation3], %s14
      %s16 = sshll.u32 [#allocation2], 4
      %s17 = int_to_ptr.vmem [resolvable:$true] %s16
      %22 = dma.hbm_to_vmem [thread:$0]  %s0, 192, %s17, [#allocation3], 32, 32, 2
    $region5: #{tpu_custom_call.1} parent=1 // pred_fallthru
      _
    // Predicated region
    $region6: #{tpu_custom_call.1} parent=1 // pred_check
      _
    $region7: #{tpu_custom_call.1} parent=1 // pred_check_branch
      %24 = sbr.rel (0) target = $region9
    $region8: #{tpu_custom_call.1} parent=1 // pred_region
      %s26 = ssub.s32 192, 192
      %27 = vsyncadd [#allocation5], %s26
      %s28 = sshll.u32 [#allocation4], 4
      %s29 = int_to_ptr.vmem [resolvable:$true] %s28
      %34 = dma.hbm_to_vmem [thread:$0]  %s1, 192, %s29, [#allocation5], 32, 32, 2
    $region9: #{tpu_custom_call.1} parent=1 // pred_fallthru
      _
    // Predicated region
    $region10: #{tpu_custom_call.1} parent=1 // pred_check
      _
    $region11: #{tpu_custom_call.1} parent=1 // pred_check_branch
      %36 = sbr.rel (0) target = $region13
    $region12: #{tpu_custom_call.1} parent=1 // pred_region
      %37 = dma.done [#allocation3], 192
    $region13: #{tpu_custom_call.1} parent=1 // pred_fallthru
      _
    // Predicated region
    $region14: #{tpu_custom_call.1} parent=1 // pred_check
      _
    $region15: #{tpu_custom_call.1} parent=1 // pred_check_branch
      %39 = sbr.rel (0) target = $region17
    $region16: #{tpu_custom_call.1} parent=1 // pred_region
      %40 = dma.done [#allocation5], 192
    $region17: #{tpu_custom_call.1} parent=1 // pred_fallthru
      _
    %p41 = scmp.eq.s32.totalorder 0, 0
    // Predicated region
    $region18: #{tpu_custom_call.1} parent=1 // pred_check
      %p42 = pneg %p41
    $region19: #{tpu_custom_call.1} parent=1 // pred_check_branch
      %44 = sbr.rel (%p42) target = $region21
    $region20: #{tpu_custom_call.1} parent=1 // pred_region
      %vm45 = vcmask 5120
      %46 = vst.msk [vmem:[%s2] sm:$0x3f] %vm45, 0.0
      %47 = vst.msk [vmem:[%s3] sm:$0x3f] %vm45, 0.0
    $region21: #{tpu_custom_call.1} parent=1 // pred_fallthru
      _
    %v48 = vld [vmem:[#allocation2] sm:$0x3]
    %v49 = vld [vmem:[#allocation2 + $0x2] sm:$0x3]
    %v50 = vld [vmem:[#allocation2 + $0x4] sm:$0x3]
    %v51 = vld [vmem:[#allocation2 + $0x6] sm:$0x3]
    %v52 = vld [vmem:[#allocation2 + $0x8] sm:$0x3]
    %v53 = vld [vmem:[#allocation2 + $0xa] sm:$0x3]
    %v54 = vld [vmem:[#allocation4] sm:$0x3]
    %v55 = vld [vmem:[#allocation4 + $0x2] sm:$0x3]
    %v56 = vld [vmem:[#allocation4 + $0x4] sm:$0x3]
    %v57 = vld [vmem:[#allocation4 + $0x6] sm:$0x3]
    %v58 = vld [vmem:[#allocation4 + $0x8] sm:$0x3]
    %v59 = vld [vmem:[#allocation4 + $0xa] sm:$0x3]
    %vm60 = vcmp.ge.f32.partialorder %v48, 0.0
    %vm61 = vcmp.ge.f32.partialorder %v49, 0.0
    %vm62 = vcmp.ge.f32.partialorder %v50, 0.0
    %vm63 = vcmp.ge.f32.partialorder %v51, 0.0
    %vm64 = vcmp.ge.f32.partialorder %v52, 0.0
    %vm65 = vcmp.ge.f32.partialorder %v53, 0.0
    %v66 = vsel %vm60, 1, 0
    %v67 = vsel %vm61, 1, 0
    %v68 = vsel %vm62, 1, 0
    %v69 = vsel %vm63, 1, 0
    %v70 = vsel %vm64, 1, 0
    %v71 = vsel %vm65, 1, 0
    %v72 = vcvt.s32.f32 %v66
    %v73 = vcvt.s32.f32 %v67
    %v74 = vcvt.s32.f32 %v68
    %v75 = vcvt.s32.f32 %v69
    %v76 = vcvt.s32.f32 %v70
    %v77 = vcvt.s32.f32 %v71
    %v78 = vld [vmem:[%s2] sm:$0x3f]
    %v79 = vmul.f32 %v72, %v54
    %v80 = vmul.f32 %v73, %v55
    %v81 = vmul.f32 %v74, %v56
    %v82 = vmul.f32 %v75, %v57
    %v83 = vmul.f32 %v76, %v58
    %v84 = vmul.f32 %v77, %v59
    %vm85 = vcmask 1041408
    %v86 = vsel %vm85, %v79, 0.0
    %87 = vadd.xlane.f32.xlu0 %v86
    %v88 = vpop.xlane.xlu0 %87
    %v89 = vsel %vm85, %v80, 0.0
    %90 = vadd.xlane.f32.xlu0 %v89
    %v91 = vpop.xlane.xlu0 %90
    %v92 = vsel %vm85, %v81, 0.0
    %93 = vadd.xlane.f32.xlu0 %v92
    %v94 = vpop.xlane.xlu0 %93
    %v95 = vsel %vm85, %v82, 0.0
    %96 = vadd.xlane.f32.xlu0 %v95
    %v97 = vpop.xlane.xlu0 %96
    %v98 = vsel %vm85, %v83, 0.0
    %99 = vadd.xlane.f32.xlu0 %v98
    %v100 = vpop.xlane.xlu0 %99
    %v101 = vsel %vm85, %v84, 0.0
    %102 = vadd.xlane.f32.xlu0 %v101
    %v103 = vpop.xlane.xlu0 %102
    %v110 = vlaneseq
    %v111 = vand.u32 %v110, 127
    %v112 = vlaneseq
    %v113 = vshrl.u32 %v112, 7
    %v114 = vsub.s32 %v111, %v113
    %v115 = vrot.slane %v88, %v114
    %v116 = vlaneseq
    %v117 = vshrl.u32 %v116, 7
    %v118 = vsub.s32 %v111, %v117
    %v119 = vrot.slane %v91, %v118
    %v120 = vlaneseq
    %v121 = vshrl.u32 %v120, 7
    %v122 = vsub.s32 %v111, %v121
    %v123 = vrot.slane %v94, %v122
    %v124 = vlaneseq
    %v125 = vshrl.u32 %v124, 7
    %v126 = vsub.s32 %v111, %v125
    %v127 = vrot.slane %v97, %v126
    %v128 = vlaneseq
    %v129 = vshrl.u32 %v128, 7
    %v130 = vsub.s32 %v111, %v129
    %v131 = vrot.slane %v100, %v130
    %v132 = vlaneseq
    %v133 = vshrl.u32 %v132, 7
    %v134 = vsub.s32 %v111, %v133
    %v135 = vrot.slane %v103, %v134
    %vm136 = vcmask 1041409
    %v137 = vsel %vm136, %v119, %v115
    %vm138 = vcmask 1042434
    %v139 = vsel %vm138, %v123, %v137
    %vm140 = vcmask 1043459
    %v141 = vsel %vm140, %v127, %v139
    %vm142 = vcmask 1044484
    %v143 = vsel %vm142, %v131, %v141
    %vm144 = vcmask 1045509
    %v145 = vsel %vm144, %v135, %v143
    %vm147 = vcmask 13312
    %v148 = vsel %vm147, %v145, 0.0
    %149 = vadd.xlane.f32.xlu0 %v148
    %v150 = vpop.xlane.xlu0 %149
    %v151 = vadd.f32 %v78, %v150
    %vm152 = vcmask 5120
    %153 = vst.msk [vmem:[%s2] sm:$0x3f] %vm152, %v151
    %v154 = vld [vmem:[%s3] sm:$0x3f]
    %v155 = vadd.f32 %v72, %v54
    %v156 = vadd.f32 %v73, %v55
    %v157 = vadd.f32 %v74, %v56
    %v158 = vadd.f32 %v75, %v57
    %v159 = vadd.f32 %v76, %v58
    %v160 = vadd.f32 %v77, %v59
    %v161 = vsel %vm85, %v155, 0.0
    %162 = vadd.xlane.f32.xlu0 %v161
    %v163 = vpop.xlane.xlu0 %162
    %v164 = vsel %vm85, %v156, 0.0
    %165 = vadd.xlane.f32.xlu0 %v164
    %v166 = vpop.xlane.xlu0 %165
    %v167 = vsel %vm85, %v157, 0.0
    %168 = vadd.xlane.f32.xlu0 %v167
    %v169 = vpop.xlane.xlu0 %168
    %v170 = vsel %vm85, %v158, 0.0
    %171 = vadd.xlane.f32.xlu0 %v170
    %v172 = vpop.xlane.xlu0 %171
    %v173 = vsel %vm85, %v159, 0.0
    %174 = vadd.xlane.f32.xlu0 %v173
    %v175 = vpop.xlane.xlu0 %174
    %v176 = vsel %vm85, %v160, 0.0
    %177 = vadd.xlane.f32.xlu0 %v176
    %v178 = vpop.xlane.xlu0 %177
    %v185 = vlaneseq
    %v186 = vshrl.u32 %v185, 7
    %v187 = vsub.s32 %v111, %v186
    %v188 = vrot.slane %v163, %v187
    %v189 = vlaneseq
    %v190 = vshrl.u32 %v189, 7
    %v191 = vsub.s32 %v111, %v190
    %v192 = vrot.slane %v166, %v191
    %v193 = vlaneseq
    %v194 = vshrl.u32 %v193, 7
    %v195 = vsub.s32 %v111, %v194
    %v196 = vrot.slane %v169, %v195
    %v197 = vlaneseq
    %v198 = vshrl.u32 %v197, 7
    %v199 = vsub.s32 %v111, %v198
    %v200 = vrot.slane %v172, %v199
    %v201 = vlaneseq
    %v202 = vshrl.u32 %v201, 7
    %v203 = vsub.s32 %v111, %v202
    %v204 = vrot.slane %v175, %v203
    %v205 = vlaneseq
    %v206 = vshrl.u32 %v205, 7
    %v207 = vsub.s32 %v111, %v206
    %v208 = vrot.slane %v178, %v207
    %v209 = vsel %vm136, %v192, %v188
    %v210 = vsel %vm138, %v196, %v209
    %v211 = vsel %vm140, %v200, %v210
    %v212 = vsel %vm142, %v204, %v211
    %v213 = vsel %vm144, %v208, %v212
    %v215 = vsel %vm147, %v213, 0.0
    %216 = vadd.xlane.f32.xlu0 %v215
    %v217 = vpop.xlane.xlu0 %216
    %v218 = vadd.f32 %v154, %v217
    %219 = vst.msk [vmem:[%s3] sm:$0x3f] %vm152, %v218
    // Predicated region
    $region22: #{tpu_custom_call.1} parent=1 // pred_check
      _
    $region23: #{tpu_custom_call.1} parent=1 // pred_check_branch
      %221 = sbr.rel (0) target = $region25
    $region24: #{tpu_custom_call.1} parent=1 // pred_region
      _
    $region25: #{tpu_custom_call.1} parent=1 // pred_fallthru
      _
    // Predicated region
    $region26: #{tpu_custom_call.1} parent=1 // pred_check
      _
    $region27: #{tpu_custom_call.1} parent=1 // pred_check_branch
      %223 = sbr.rel (0) target = $region29
    $region28: #{tpu_custom_call.1} parent=1 // pred_region
      _
    $region29: #{tpu_custom_call.1} parent=1 // pred_fallthru
      _
    // Predicated region
    $region30: #{tpu_custom_call.1} parent=1 // pred_check
      _
    $region31: #{tpu_custom_call.1} parent=1 // pred_check_branch
      %225 = sbr.rel (0) target = $region33
    $region32: #{tpu_custom_call.1} parent=1 // pred_region
      _
    $region33: #{tpu_custom_call.1} parent=1 // pred_fallthru
      _
    // Predicated region
    $region34: #{tpu_custom_call.1} parent=1 // pred_check
      _
    $region35: #{tpu_custom_call.1} parent=1 // pred_check_branch
      %227 = sbr.rel (0) target = $region37
    $region36: #{tpu_custom_call.1} parent=1 // pred_region
      _
    $region37: #{tpu_custom_call.1} parent=1 // pred_fallthru
      _
    %228 = vsyncpa [#allocation3], 1
    %229 = vsyncpa [#allocation5], 1

</llo_original>
